<compile_context>
chip_gen: v5e
topology: v5e:2x2
jax: 0.10.0
libtpu: 0.0.40
codegen_flags: <defaults>
</compile_context>

<pallas_src>
import functools

import jax
import jax.numpy as jnp
from jax.experimental import pallas as pl
from jax.experimental.pallas import tpu as pltpu

LEAKY_SLOPE = 0.2
BN_EPS = 1e-5
TILE_M_CAP = 256     # rows of the X matrix per grid step (multiple of 8)
LANE = 128           # TPU lane width: matmul-N / output last dim padded to this


# ----------------------------- Pallas kernel ------------------------------- #

def _bn_act_matmul_kernel(x_ref, w_ref, scale_ref, shift_ref, o_ref, *, apply_act):
    """o = LeakyReLU(x * scale + shift) @ w   (prologue skipped for layer 1).

    scale/shift carry the previous layer's bias + BatchNorm folded into a
    per-channel affine; w is the (Cin, k*k*Cout) transposed-conv weight matrix,
    so the stored output is lane-dense."""
    a = x_ref[...] * scale_ref[...] + shift_ref[...]       # f32 elementwise (VPU)
    if apply_act:
        a = jnp.maximum(a, LEAKY_SLOPE * a)                # LeakyReLU(0.2)
    o_ref[...] = jnp.dot(a.astype(w_ref.dtype), w_ref[...],
                         preferred_element_type=jnp.float32)


def fused_bn_act_matmul(x, w, scale, shift, *, apply_act):
    """x: (M, Cin) f32, w: (Cin, Ncols) bf16 -> (M, Ncols) f32, tiled over M."""
    M, cin = x.shape
    _, ncols = w.shape

    # Lane-dense output: pad the matmul N dimension up to a multiple of 128.
    n_pad = (-ncols) % LANE
    if n_pad:
        w = jnp.pad(w, ((0, 0), (0, n_pad)))
    ncols_p = ncols + n_pad

    # Tile over M; pad rows so the (sublane-aligned) tile divides the extent.
    mp = ((M + 7) // 8) * 8
    if mp <= TILE_M_CAP:
        tile_m = mp
    else:
        tile_m = TILE_M_CAP
        mp = ((M + tile_m - 1) // tile_m) * tile_m
    if mp != M:
        x = jnp.pad(x, ((0, mp - M), (0, 0)))

    out = pl.pallas_call(
        functools.partial(_bn_act_matmul_kernel, apply_act=apply_act),
        out_shape=jax.ShapeDtypeStruct((mp, ncols_p), jnp.float32),
        grid=(mp // tile_m,),
        in_specs=[
            pl.BlockSpec((tile_m, cin), lambda i: (i, 0)),
            pl.BlockSpec((cin, ncols_p), lambda i: (0, 0)),
            pl.BlockSpec((1, cin), lambda i: (0, 0)),
            pl.BlockSpec((1, cin), lambda i: (0, 0)),
        ],
        out_specs=pl.BlockSpec((tile_m, ncols_p), lambda i: (i, 0)),
        compiler_params=pltpu.CompilerParams(
            dimension_semantics=("parallel",)),
    )(x, w, scale.reshape(1, cin), shift.reshape(1, cin))
    return out[:M, :ncols]


# ------------------------------ JAX glue ----------------------------------- #

def _weight_to_matrix(w_t):
    """PyTorch ConvTranspose2d weight (Cin, Cout, kH, kW) -> (Cin, kH*kW*Cout)
    for the direct transposed-conv matmul (no kernel flip, no zero dilation)."""
    cin, cout, kh, kw = w_t.shape
    return jnp.transpose(w_t, (0, 2, 3, 1)).reshape(cin, kh * kw * cout)


def _overlap_add(p6, stride, pad):
    """Scatter-free overlap-add: canvas[s*ih+kh, s*iw+kw] += p6[ih, iw, kh, kw],
    then crop `pad` rows/cols from every side.  p6: (N, IH, IW, k, k, C)."""
    _, ih, iw, k, _, _ = p6.shape
    assert k % stride == 0
    tpp = k // stride                                   # taps per output phase

    def fold(arr, spatial_axis, tap_axis, in_len):
        hs = in_len + tpp - 1                           # per-phase canvas length
        phases = []
        for ph in range(stride):
            acc = None
            for t in range(tpp):
                tap = jax.lax.index_in_dim(arr, ph + t * stride, axis=tap_axis,
                                           keepdims=False)
                padw = [(0, 0)] * tap.ndim
                padw[spatial_axis] = (t, hs - in_len - t)
                tap = jnp.pad(tap, padw)
                acc = tap if acc is None else acc + tap
            phases.append(acc)
        q = jnp.stack(phases, axis=spatial_axis + 1)    # (..., hs, stride, ...)
        shape = list(q.shape)
        shape[spatial_axis] = hs * stride
        del shape[spatial_axis + 1]
        return q.reshape(shape)                         # interleave the phases

    q = fold(p6, spatial_axis=1, tap_axis=3, in_len=ih)      # rows: ih x kh
    canvas = fold(q, spatial_axis=2, tap_axis=3, in_len=iw)  # cols: iw x kw
    oh = (ih - 1) * stride - 2 * pad + k
    ow = (iw - 1) * stride - 2 * pad + k
    return canvas[:, pad:pad + oh, pad:pad + ow, :]


def _bn_scale_shift(y, bias, gamma, beta):
    """Fold bias + train-mode BatchNorm2d (batch stats, biased var, eps=1e-5)
    into a per-channel affine applied to the raw conv output y (N, H, W, C)."""
    mean = jnp.mean(y, axis=(0, 1, 2)) + bias
    var = jnp.mean(jnp.square(y + bias - mean), axis=(0, 1, 2))
    scale = gamma * jax.lax.rsqrt(var + BN_EPS)
    shift = beta + (bias - mean) * scale
    return scale, shift


def _conv_transpose_layer(x_flat, spatial, w_t, stride, pad, scale, shift, apply_act):
    """act(BN(x)) -> ConvTranspose2d(w_t) for an NHWC activation flattened to
    (N*IH*IW, Cin); returns the raw conv output (N, OH, OW, Cout)."""
    n_ihiw, _ = x_flat.shape
    ih, iw = spatial
    n = n_ihiw // (ih * iw)
    cout, k = w_t.shape[1], w_t.shape[2]
    wmat = _weight_to_matrix(w_t).astype(jnp.bfloat16)
    p = fused_bn_act_matmul(x_flat, wmat, scale, shift, apply_act=apply_act)
    p6 = p.reshape(n, ih, iw, k, k, cout)
    return _overlap_add(p6, stride, pad)


# ----------------------------- Generator ----------------------------------- #

def init_generator_params(key, num_channels, latent_dim, hidden_dim):
    ks = jax.random.split(key, 8)
    w = lambda k_, shape: 0.05 * jax.random.normal(k_, shape, jnp.float32)
    hd = hidden_dim
    return {
        # ConvTranspose2d weights are (Cin, Cout, kH, kW), as in PyTorch.
        "w1": w(ks[0], (latent_dim, hd * 4, 4, 4)), "b1": w(ks[1], (hd * 4,)),
        "g1": jnp.ones((hd * 4,), jnp.float32), "be1": jnp.zeros((hd * 4,), jnp.float32),
        "w2": w(ks[2], (hd * 4, hd * 2, 4, 4)), "b2": w(ks[3], (hd * 2,)),
        "g2": jnp.ones((hd * 2,), jnp.float32), "be2": jnp.zeros((hd * 2,), jnp.float32),
        "w3": w(ks[4], (hd * 2, hd, 4, 4)), "b3": w(ks[5], (hd,)),
        "g3": jnp.ones((hd,), jnp.float32), "be3": jnp.zeros((hd,), jnp.float32),
        "w4": w(ks[6], (hd, num_channels, 4, 4)),          # last layer: bias=False
    }


@jax.jit
def generator_forward(z_nchw, params):
    """z: (N, latent_dim, 1, 1) NCHW -> image (N, num_channels, 32, 32) NCHW."""
    n = z_nchw.shape[0]
    z = z_nchw.astype(jnp.float32).reshape(n, -1)                 # (N, latent)
    latent = z.shape[1]
    ident = (jnp.ones((latent,), jnp.float32), jnp.zeros((latent,), jnp.float32))

    # Layer 1: ConvT(latent->4h, k4,s1,p0)+bias ; BN ; LeakyReLU (folded forward)
    y1 = _conv_transpose_layer(z, (1, 1), params["w1"], 1, 0, *ident, False)
    s1, t1 = _bn_scale_shift(y1, params["b1"], params["g1"], params["be1"])

    # Layer 2: ConvT(4h->2h, k4,s2,p1)+bias ; BN ; LeakyReLU
    y2 = _conv_transpose_layer(y1.reshape(n * 16, -1), (4, 4),
                               params["w2"], 2, 1, s1, t1, True)
    s2, t2 = _bn_scale_shift(y2, params["b2"], params["g2"], params["be2"])

    # Layer 3: ConvT(2h->h, k4,s2,p1)+bias ; BN ; LeakyReLU
    y3 = _conv_transpose_layer(y2.reshape(n * 64, -1), (8, 8),
                               params["w3"], 2, 1, s2, t2, True)
    s3, t3 = _bn_scale_shift(y3, params["b3"], params["g3"], params["be3"])

    # Layer 4: ConvT(h->nc, k4,s2,p1, bias=False) ; Tanh
    y4 = _conv_transpose_layer(y3.reshape(n * 256, -1), (16, 16),
                               params["w4"], 2, 1, s3, t3, True)
    img = jnp.tanh(y4)                                            # tiny XLA epilogue
    return jnp.transpose(img, (0, 3, 1, 2))                       # NHWC -> NCHW


# TODO(synk): 'mlp' arch branch and restore()/save() checkpoint file I/O are not
#             translated (only the default 'cnn' forward path is needed).


if __name__ == "__main__":
    num_channels, latent_dim, hidden_dim, batch = 3, 16, 8, 2

    key = jax.random.PRNGKey(0)
    kz, kp = jax.random.split(key)
    z = jax.random.normal(kz, (batch, latent_dim, 1, 1), jnp.float32)
    params = init_generator_params(kp, num_channels, latent_dim, hidden_dim)

    out = generator_forward(z, params)
    out = jax.block_until_ready(out)

    assert out.shape == (batch, num_channels, 32, 32), out.shape
    assert bool(jnp.all(jnp.isfinite(out)))
    assert bool(jnp.all(jnp.abs(out) <= 1.0))  # tanh output range
    print("KERNEL_OK")
</pallas_src>

<mosaic_0001>
module attributes {stable_mosaic.version = 11 : i64} {
  func.func @_bn_act_matmul_kernel(%arg0: i32, %arg1: memref<8x16xf32, #tpu.memory_space<vmem>>, %arg2: memref<16x512xbf16, #tpu.memory_space<vmem>>, %arg3: memref<1x16xf32, #tpu.memory_space<vmem>>, %arg4: memref<1x16xf32, #tpu.memory_space<vmem>>, %arg5: memref<8x512xf32, #tpu.memory_space<vmem>>) attributes {dimension_semantics = [#tpu.dimension_semantics<parallel>], iteration_bounds = array<i64: 1>, scalar_prefetch = 0 : i64, scratch_operands = 0 : i64, tpu.core_type = #tpu.core_type<tc>, window_params = [{transform_indices = @transform_0, window_bounds = array<i64: 8, 16>}, {pipeline_mode = #tpu.pipeline_mode<synchronous>, transform_indices = @transform_1, window_bounds = array<i64: 16, 512>}, {pipeline_mode = #tpu.pipeline_mode<synchronous>, transform_indices = @transform_2, window_bounds = array<i64: 1, 16>}, {pipeline_mode = #tpu.pipeline_mode<synchronous>, transform_indices = @transform_3, window_bounds = array<i64: 1, 16>}, {transform_indices = @transform_4, window_bounds = array<i64: 8, 512>}]} {
    %c0 = arith.constant 0 : index
    %c0_0 = arith.constant 0 : index
    %0 = vector.load %arg1[%c0, %c0_0] : memref<8x16xf32, #tpu.memory_space<vmem>>, vector<8x16xf32>
    %c0_1 = arith.constant 0 : index
    %c0_2 = arith.constant 0 : index
    %1 = vector.load %arg3[%c0_1, %c0_2] : memref<1x16xf32, #tpu.memory_space<vmem>>, vector<1x16xf32>
    %2 = vector.broadcast %1 : vector<1x16xf32> to vector<8x16xf32>
    %3 = arith.mulf %0, %2 : vector<8x16xf32>
    %c0_3 = arith.constant 0 : index
    %c0_4 = arith.constant 0 : index
    %4 = vector.load %arg4[%c0_3, %c0_4] : memref<1x16xf32, #tpu.memory_space<vmem>>, vector<1x16xf32>
    %5 = vector.broadcast %4 : vector<1x16xf32> to vector<8x16xf32>
    %6 = arith.addf %3, %5 : vector<8x16xf32>
    %7 = arith.truncf %6 : vector<8x16xf32> to vector<8x16xbf16>
    %c0_5 = arith.constant 0 : index
    %c0_6 = arith.constant 0 : index
    %8 = vector.load %arg2[%c0_5, %c0_6] : memref<16x512xbf16, #tpu.memory_space<vmem>>, vector<16x512xbf16>
    %cst = arith.constant dense<0.000000e+00> : vector<8x512xf32>
    %9 = tpu.matmul %7, %8, %cst {dimension_numbers = #tpu.dot_dimension_numbers<[1], [0], [0], [1], [0, 0, 1, 1], [], []>} : vector<8x16xbf16>, vector<16x512xbf16>, vector<8x512xf32> -> vector<8x512xf32>
    %c0_7 = arith.constant 0 : index
    %c0_8 = arith.constant 0 : index
    %10 = vector.load %arg5[%c0_7, %c0_8] : memref<8x512xf32, #tpu.memory_space<vmem>>, vector<8x512xf32>
    tpu.vector_store %arg5[%c0_7, %c0_8], %9 {strides = array<i32>} : memref<8x512xf32, #tpu.memory_space<vmem>>, vector<8x512xf32>,
    return
  }
  func.func @transform_0(%arg0: i32) -> (i32, i32) {
    %c0_i32 = arith.constant 0 : i32
    %c0_i32_0 = arith.constant 0 : i32
    return %arg0, %c0_i32 : i32, i32
  }
  func.func @transform_1(%arg0: i32) -> (i32, i32) {
    %c0_i32 = arith.constant 0 : i32
    %c0_i32_0 = arith.constant 0 : i32
    %c0_i32_1 = arith.constant 0 : i32
    return %c0_i32, %c0_i32_0 : i32, i32
  }
  func.func @transform_2(%arg0: i32) -> (i32, i32) {
    %c0_i32 = arith.constant 0 : i32
    %c0_i32_0 = arith.constant 0 : i32
    %c0_i32_1 = arith.constant 0 : i32
    return %c0_i32, %c0_i32_0 : i32, i32
  }
  func.func @transform_3(%arg0: i32) -> (i32, i32) {
    %c0_i32 = arith.constant 0 : i32
    %c0_i32_0 = arith.constant 0 : i32
    %c0_i32_1 = arith.constant 0 : i32
    return %c0_i32, %c0_i32_0 : i32, i32
  }
  func.func @transform_4(%arg0: i32) -> (i32, i32) {
    %c0_i32 = arith.constant 0 : i32
    %c0_i32_0 = arith.constant 0 : i32
    return %arg0, %c0_i32 : i32, i32
  }
}

module attributes {stable_mosaic.version = 11 : i64} {
  func.func @_bn_act_matmul_kernel(%arg0: i32, %arg1: memref<32x32xf32, #tpu.memory_space<vmem>>, %arg2: memref<32x256xbf16, #tpu.memory_space<vmem>>, %arg3: memref<1x32xf32, #tpu.memory_space<vmem>>, %arg4: memref<1x32xf32, #tpu.memory_space<vmem>>, %arg5: memref<32x256xf32, #tpu.memory_space<vmem>>) attributes {dimension_semantics = [#tpu.dimension_semantics<parallel>], iteration_bounds = array<i64: 1>, scalar_prefetch = 0 : i64, scratch_operands = 0 : i64, tpu.core_type = #tpu.core_type<tc>, window_params = [{transform_indices = @transform_0, window_bounds = array<i64: 32, 32>}, {pipeline_mode = #tpu.pipeline_mode<synchronous>, transform_indices = @transform_1, window_bounds = array<i64: 32, 256>}, {pipeline_mode = #tpu.pipeline_mode<synchronous>, transform_indices = @transform_2, window_bounds = array<i64: 1, 32>}, {pipeline_mode = #tpu.pipeline_mode<synchronous>, transform_indices = @transform_3, window_bounds = array<i64: 1, 32>}, {transform_indices = @transform_4, window_bounds = array<i64: 32, 256>}]} {
    %c0 = arith.constant 0 : index
    %c0_0 = arith.constant 0 : index
    %0 = vector.load %arg1[%c0, %c0_0] : memref<32x32xf32, #tpu.memory_space<vmem>>, vector<32x32xf32>
    %c0_1 = arith.constant 0 : index
    %c0_2 = arith.constant 0 : index
    %1 = vector.load %arg3[%c0_1, %c0_2] : memref<1x32xf32, #tpu.memory_space<vmem>>, vector<1x32xf32>
    %2 = vector.broadcast %1 : vector<1x32xf32> to vector<32x32xf32>
    %3 = arith.mulf %0, %2 : vector<32x32xf32>
    %c0_3 = arith.constant 0 : index
    %c0_4 = arith.constant 0 : index
    %4 = vector.load %arg4[%c0_3, %c0_4] : memref<1x32xf32, #tpu.memory_space<vmem>>, vector<1x32xf32>
    %5 = vector.broadcast %4 : vector<1x32xf32> to vector<32x32xf32>
    %6 = arith.addf %3, %5 : vector<32x32xf32>
    %cst = arith.constant 2.000000e-01 : f32
    %7 = vector.broadcast %cst : f32 to vector<32x32xf32>
    %8 = arith.mulf %7, %6 : vector<32x32xf32>
    %9 = arith.maximumf %6, %8 : vector<32x32xf32>
    %10 = arith.truncf %9 : vector<32x32xf32> to vector<32x32xbf16>
    %c0_5 = arith.constant 0 : index
    %c0_6 = arith.constant 0 : index
    %11 = vector.load %arg2[%c0_5, %c0_6] : memref<32x256xbf16, #tpu.memory_space<vmem>>, vector<32x256xbf16>
    %cst_7 = arith.constant dense<0.000000e+00> : vector<32x256xf32>
    %12 = tpu.matmul %10, %11, %cst_7 {dimension_numbers = #tpu.dot_dimension_numbers<[1], [0], [0], [1], [0, 0, 1, 1], [], []>} : vector<32x32xbf16>, vector<32x256xbf16>, vector<32x256xf32> -> vector<32x256xf32>
    %c0_8 = arith.constant 0 : index
    %c0_9 = arith.constant 0 : index
    %13 = vector.load %arg5[%c0_8, %c0_9] : memref<32x256xf32, #tpu.memory_space<vmem>>, vector<32x256xf32>
    tpu.vector_store %arg5[%c0_8, %c0_9], %12 {strides = array<i32>} : memref<32x256xf32, #tpu.memory_space<vmem>>, vector<32x256xf32>,
    return
  }
  func.func @transform_0(%arg0: i32) -> (i32, i32) {
    %c0_i32 = arith.constant 0 : i32
    %c0_i32_0 = arith.constant 0 : i32
    return %arg0, %c0_i32 : i32, i32
  }
  func.func @transform_1(%arg0: i32) -> (i32, i32) {
    %c0_i32 = arith.constant 0 : i32
    %c0_i32_0 = arith.constant 0 : i32
    %c0_i32_1 = arith.constant 0 : i32
    return %c0_i32, %c0_i32_0 : i32, i32
  }
  func.func @transform_2(%arg0: i32) -> (i32, i32) {
    %c0_i32 = arith.constant 0 : i32
    %c0_i32_0 = arith.constant 0 : i32
    %c0_i32_1 = arith.constant 0 : i32
    return %c0_i32, %c0_i32_0 : i32, i32
  }
  func.func @transform_3(%arg0: i32) -> (i32, i32) {
    %c0_i32 = arith.constant 0 : i32
    %c0_i32_0 = arith.constant 0 : i32
    %c0_i32_1 = arith.constant 0 : i32
    return %c0_i32, %c0_i32_0 : i32, i32
  }
  func.func @transform_4(%arg0: i32) -> (i32, i32) {
    %c0_i32 = arith.constant 0 : i32
    %c0_i32_0 = arith.constant 0 : i32
    return %arg0, %c0_i32 : i32, i32
  }
}

module attributes {stable_mosaic.version = 11 : i64} {
  func.func @_bn_act_matmul_kernel(%arg0: i32, %arg1: memref<128x16xf32, #tpu.memory_space<vmem>>, %arg2: memref<16x128xbf16, #tpu.memory_space<vmem>>, %arg3: memref<1x16xf32, #tpu.memory_space<vmem>>, %arg4: memref<1x16xf32, #tpu.memory_space<vmem>>, %arg5: memref<128x128xf32, #tpu.memory_space<vmem>>) attributes {dimension_semantics = [#tpu.dimension_semantics<parallel>], iteration_bounds = array<i64: 1>, scalar_prefetch = 0 : i64, scratch_operands = 0 : i64, tpu.core_type = #tpu.core_type<tc>, window_params = [{transform_indices = @transform_0, window_bounds = array<i64: 128, 16>}, {pipeline_mode = #tpu.pipeline_mode<synchronous>, transform_indices = @transform_1, window_bounds = array<i64: 16, 128>}, {pipeline_mode = #tpu.pipeline_mode<synchronous>, transform_indices = @transform_2, window_bounds = array<i64: 1, 16>}, {pipeline_mode = #tpu.pipeline_mode<synchronous>, transform_indices = @transform_3, window_bounds = array<i64: 1, 16>}, {transform_indices = @transform_4, window_bounds = array<i64: 128, 128>}]} {
    %c0 = arith.constant 0 : index
    %c0_0 = arith.constant 0 : index
    %0 = vector.load %arg1[%c0, %c0_0] : memref<128x16xf32, #tpu.memory_space<vmem>>, vector<128x16xf32>
    %c0_1 = arith.constant 0 : index
    %c0_2 = arith.constant 0 : index
    %1 = vector.load %arg3[%c0_1, %c0_2] : memref<1x16xf32, #tpu.memory_space<vmem>>, vector<1x16xf32>
    %2 = vector.broadcast %1 : vector<1x16xf32> to vector<128x16xf32>
    %3 = arith.mulf %0, %2 : vector<128x16xf32>
    %c0_3 = arith.constant 0 : index
    %c0_4 = arith.constant 0 : index
    %4 = vector.load %arg4[%c0_3, %c0_4] : memref<1x16xf32, #tpu.memory_space<vmem>>, vector<1x16xf32>
    %5 = vector.broadcast %4 : vector<1x16xf32> to vector<128x16xf32>
    %6 = arith.addf %3, %5 : vector<128x16xf32>
    %cst = arith.constant 2.000000e-01 : f32
    %7 = vector.broadcast %cst : f32 to vector<128x16xf32>
    %8 = arith.mulf %7, %6 : vector<128x16xf32>
    %9 = arith.maximumf %6, %8 : vector<128x16xf32>
    %10 = arith.truncf %9 : vector<128x16xf32> to vector<128x16xbf16>
    %c0_5 = arith.constant 0 : index
    %c0_6 = arith.constant 0 : index
    %11 = vector.load %arg2[%c0_5, %c0_6] : memref<16x128xbf16, #tpu.memory_space<vmem>>, vector<16x128xbf16>
    %cst_7 = arith.constant dense<0.000000e+00> : vector<128x128xf32>
    %12 = tpu.matmul %10, %11, %cst_7 {dimension_numbers = #tpu.dot_dimension_numbers<[1], [0], [0], [1], [0, 0, 1, 1], [], []>} : vector<128x16xbf16>, vector<16x128xbf16>, vector<128x128xf32> -> vector<128x128xf32>
    %c0_8 = arith.constant 0 : index
    %c0_9 = arith.constant 0 : index
    %13 = vector.load %arg5[%c0_8, %c0_9] : memref<128x128xf32, #tpu.memory_space<vmem>>, vector<128x128xf32>
    tpu.vector_store %arg5[%c0_8, %c0_9], %12 {strides = array<i32>} : memref<128x128xf32, #tpu.memory_space<vmem>>, vector<128x128xf32>,
    return
  }
  func.func @transform_0(%arg0: i32) -> (i32, i32) {
    %c0_i32 = arith.constant 0 : i32
    %c0_i32_0 = arith.constant 0 : i32
    return %arg0, %c0_i32 : i32, i32
  }
  func.func @transform_1(%arg0: i32) -> (i32, i32) {
    %c0_i32 = arith.constant 0 : i32
    %c0_i32_0 = arith.constant 0 : i32
    %c0_i32_1 = arith.constant 0 : i32
    return %c0_i32, %c0_i32_0 : i32, i32
  }
  func.func @transform_2(%arg0: i32) -> (i32, i32) {
    %c0_i32 = arith.constant 0 : i32
    %c0_i32_0 = arith.constant 0 : i32
    %c0_i32_1 = arith.constant 0 : i32
    return %c0_i32, %c0_i32_0 : i32, i32
  }
  func.func @transform_3(%arg0: i32) -> (i32, i32) {
    %c0_i32 = arith.constant 0 : i32
    %c0_i32_0 = arith.constant 0 : i32
    %c0_i32_1 = arith.constant 0 : i32
    return %c0_i32, %c0_i32_0 : i32, i32
  }
  func.func @transform_4(%arg0: i32) -> (i32, i32) {
    %c0_i32 = arith.constant 0 : i32
    %c0_i32_0 = arith.constant 0 : i32
    return %arg0, %c0_i32 : i32, i32
  }
}

module attributes {stable_mosaic.version = 11 : i64} {
  func.func @_bn_act_matmul_kernel(%arg0: i32, %arg1: memref<256x8xf32, #tpu.memory_space<vmem>>, %arg2: memref<8x128xbf16, #tpu.memory_space<vmem>>, %arg3: memref<1x8xf32, #tpu.memory_space<vmem>>, %arg4: memref<1x8xf32, #tpu.memory_space<vmem>>, %arg5: memref<256x128xf32, #tpu.memory_space<vmem>>) attributes {dimension_semantics = [#tpu.dimension_semantics<parallel>], iteration_bounds = array<i64: 2>, scalar_prefetch = 0 : i64, scratch_operands = 0 : i64, tpu.core_type = #tpu.core_type<tc>, window_params = [{transform_indices = @transform_0, window_bounds = array<i64: 256, 8>}, {pipeline_mode = #tpu.pipeline_mode<synchronous>, transform_indices = @transform_1, window_bounds = array<i64: 8, 128>}, {pipeline_mode = #tpu.pipeline_mode<synchronous>, transform_indices = @transform_2, window_bounds = array<i64: 1, 8>}, {pipeline_mode = #tpu.pipeline_mode<synchronous>, transform_indices = @transform_3, window_bounds = array<i64: 1, 8>}, {transform_indices = @transform_4, window_bounds = array<i64: 256, 128>}]} {
    %c0 = arith.constant 0 : index
    %c0_0 = arith.constant 0 : index
    %0 = vector.load %arg1[%c0, %c0_0] : memref<256x8xf32, #tpu.memory_space<vmem>>, vector<256x8xf32>
    %c0_1 = arith.constant 0 : index
    %c0_2 = arith.constant 0 : index
    %1 = vector.load %arg3[%c0_1, %c0_2] : memref<1x8xf32, #tpu.memory_space<vmem>>, vector<1x8xf32>
    %2 = vector.broadcast %1 : vector<1x8xf32> to vector<256x8xf32>
    %3 = arith.mulf %0, %2 : vector<256x8xf32>
    %c0_3 = arith.constant 0 : index
    %c0_4 = arith.constant 0 : index
    %4 = vector.load %arg4[%c0_3, %c0_4] : memref<1x8xf32, #tpu.memory_space<vmem>>, vector<1x8xf32>
    %5 = vector.broadcast %4 : vector<1x8xf32> to vector<256x8xf32>
    %6 = arith.addf %3, %5 : vector<256x8xf32>
    %cst = arith.constant 2.000000e-01 : f32
    %7 = vector.broadcast %cst : f32 to vector<256x8xf32>
    %8 = arith.mulf %7, %6 : vector<256x8xf32>
    %9 = arith.maximumf %6, %8 : vector<256x8xf32>
    %10 = arith.truncf %9 : vector<256x8xf32> to vector<256x8xbf16>
    %c0_5 = arith.constant 0 : index
    %c0_6 = arith.constant 0 : index
    %11 = vector.load %arg2[%c0_5, %c0_6] : memref<8x128xbf16, #tpu.memory_space<vmem>>, vector<8x128xbf16>
    %cst_7 = arith.constant dense<0.000000e+00> : vector<256x128xf32>
    %12 = tpu.matmul %10, %11, %cst_7 {dimension_numbers = #tpu.dot_dimension_numbers<[1], [0], [0], [1], [0, 0, 1, 1], [], []>} : vector<256x8xbf16>, vector<8x128xbf16>, vector<256x128xf32> -> vector<256x128xf32>
    %c0_8 = arith.constant 0 : index
    %c0_9 = arith.constant 0 : index
    %13 = vector.load %arg5[%c0_8, %c0_9] : memref<256x128xf32, #tpu.memory_space<vmem>>, vector<256x128xf32>
    tpu.vector_store %arg5[%c0_8, %c0_9], %12 {strides = array<i32>} : memref<256x128xf32, #tpu.memory_space<vmem>>, vector<256x128xf32>,
    return
  }
  func.func @transform_0(%arg0: i32) -> (i32, i32) {
    %c0_i32 = arith.constant 0 : i32
    %c0_i32_0 = arith.constant 0 : i32
    return %arg0, %c0_i32 : i32, i32
  }
  func.func @transform_1(%arg0: i32) -> (i32, i32) {
    %c0_i32 = arith.constant 0 : i32
    %c0_i32_0 = arith.constant 0 : i32
    %c0_i32_1 = arith.constant 0 : i32
    return %c0_i32, %c0_i32_0 : i32, i32
  }
  func.func @transform_2(%arg0: i32) -> (i32, i32) {
    %c0_i32 = arith.constant 0 : i32
    %c0_i32_0 = arith.constant 0 : i32
    %c0_i32_1 = arith.constant 0 : i32
    return %c0_i32, %c0_i32_0 : i32, i32
  }
  func.func @transform_3(%arg0: i32) -> (i32, i32) {
    %c0_i32 = arith.constant 0 : i32
    %c0_i32_0 = arith.constant 0 : i32
    %c0_i32_1 = arith.constant 0 : i32
    return %c0_i32, %c0_i32_0 : i32, i32
  }
  func.func @transform_4(%arg0: i32) -> (i32, i32) {
    %c0_i32 = arith.constant 0 : i32
    %c0_i32_0 = arith.constant 0 : i32
    return %arg0, %c0_i32 : i32, i32
  }
}

</mosaic_0001>

<llo_original>
// kernel: generator_forward.4
$region0: #{generator_forward.4}
  #allocation0 [shape = 'u32[]', space=smem, size = 0x4, offset = 0x4, fixed_abs, tag = 'smem constant byte address 0x4 - core index']
  #allocation1 [shape = 'u32[72,128]{1,0:T(1,128)}', space=vmem, size = 0x9000, scoped, tag = 'internal scratch']
  %s0 = inlined_call_operand.vmem [shape: f32[8,16], index: 0, kind: input, shape index: {}]
  %s1 = inlined_call_operand.vmem [shape: bf16[16,512], index: 1, kind: input, shape index: {}]
  %s2 = inlined_call_operand.vmem [shape: f32[1,16], index: 2, kind: input, shape index: {}]
  %s3 = inlined_call_operand.vmem [shape: f32[1,16], index: 3, kind: input, shape index: {}]
  %s4 = inlined_call_operand.vmem [shape: f32[8,512], index: 4, kind: output, shape index: {}]
  %s5 = sld [smem:[#allocation0]]
  $region26: #{generator_forward.4} parent=0
    _
  %s7 = ssub.s32 1, %s5
  %s8 = scalar_select 0, %s7, %s5
  // Predicated region
  $region2: #{generator_forward.4} parent=0 // pred_check
    _
  $region3: #{generator_forward.4} parent=0 // pred_check_branch
    %10 = sbr.rel (0) target = $region5
  $region4: #{generator_forward.4} parent=0 // pred_region
    _
  $region5: #{generator_forward.4} parent=0 // pred_fallthru
    _
  // Predicated region
  $region6: #{generator_forward.4} parent=0 // pred_check
    _
  $region7: #{generator_forward.4} parent=0 // pred_check_branch
    %12 = sbr.rel (0) target = $region9
  $region8: #{generator_forward.4} parent=0 // pred_region
    _
  $region9: #{generator_forward.4} parent=0 // pred_fallthru
    _
  // Predicated region
  $region10: #{generator_forward.4} parent=0 // pred_check
    _
  $region11: #{generator_forward.4} parent=0 // pred_check_branch
    %14 = sbr.rel (0) target = $region13
  $region12: #{generator_forward.4} parent=0 // pred_region
    _
  $region13: #{generator_forward.4} parent=0 // pred_fallthru
    _
  // Predicated region
  $region14: #{generator_forward.4} parent=0 // pred_check
    _
  $region15: #{generator_forward.4} parent=0 // pred_check_branch
    %16 = sbr.rel (0) target = $region17
  $region16: #{generator_forward.4} parent=0 // pred_region
    _
  $region17: #{generator_forward.4} parent=0 // pred_fallthru
    _
  %v18 = vld [vmem:[%s0] sm:$0xff]
  %v19 = vld [vmem:[%s2] sm:$0x1]
  %v21 = vperm.slane %v19, 0
  %v23 = vmul.f32 %v18, %v21
  %v24 = vld [vmem:[%s3] sm:$0x1]
  %v26 = vperm.slane %v24, 0
  %v28 = vadd.f32 %v23, %v26
  %v29 = vpack.c.bf16 %v28, %v28
  %v30 = vld [vmem:[%s1] sm:$0xff]
  %v31 = vld [vmem:[%s1 + $0x8] sm:$0xff]
  %v32 = vld [vmem:[%s1 + $0x10] sm:$0xff]
  %v33 = vld [vmem:[%s1 + $0x18] sm:$0xff]
  %v38 = vunpack.c.l.b16 %v30
  %v39 = vunpack.c.h.b16 %v30
  %v40 = vunpack.c.l.b16 %v31
  %v41 = vunpack.c.h.b16 %v31
  %v42 = vunpack.c.l.b16 %v32
  %v43 = vunpack.c.h.b16 %v32
  %v44 = vunpack.c.l.b16 %v33
  %v45 = vunpack.c.h.b16 %v33
  %v46 = vpack.c.b16 %v42, %v38
  %v47 = vpack.c.b16 %v43, %v39
  %v48 = vpack.c.b16 %v44, %v40
  %v49 = vpack.c.b16 %v45, %v41
  %vm54 = vcmask 130048
  %v56 = vsel %vm54, %v29, 0
  %58 = vmatpush.bf16.msra.mxu0 0
  %59 = vmatpush.bf16.msra.mxu0 0
  %60 = vmatpush.bf16.msra.mxu0 0
  %61 = vmatpush.bf16.msra.mxu0 0
  %62 = vmatpush.bf16.msra.mxu0 0
  %63 = vmatpush.bf16.msra.mxu0 0
  %64 = vmatpush.bf16.msra.mxu0 0
  %65 = vmatpush.bf16.msra.mxu0 %v46
  %66 = vmatmul.bf16.gmra.mxu0 %v56
  %v67 = vpop.f32.mrf.mxu0
  %v68 = vadd.f32 0.0, %v67
  %v69 = vpop.f32.mrf.mxu0
  %70 = vdwg.mxu0
  %71 = vmatpush.bf16.msra.mxu0 0
  %72 = vmatpush.bf16.msra.mxu0 0
  %73 = vmatpush.bf16.msra.mxu0 0
  %74 = vmatpush.bf16.msra.mxu0 0
  %75 = vmatpush.bf16.msra.mxu0 0
  %76 = vmatpush.bf16.msra.mxu0 0
  %77 = vmatpush.bf16.msra.mxu0 0
  %78 = vmatpush.bf16.msra.mxu0 %v47
  %79 = vmatmul.bf16.gmra.mxu0 %v56
  %v80 = vpop.f32.mrf.mxu0
  %v81 = vadd.f32 0.0, %v80
  %v82 = vpop.f32.mrf.mxu0
  %83 = vdwg.mxu0
  %84 = vmatpush.bf16.msra.mxu0 0
  %85 = vmatpush.bf16.msra.mxu0 0
  %86 = vmatpush.bf16.msra.mxu0 0
  %87 = vmatpush.bf16.msra.mxu0 0
  %88 = vmatpush.bf16.msra.mxu0 0
  %89 = vmatpush.bf16.msra.mxu0 0
  %90 = vmatpush.bf16.msra.mxu0 0
  %91 = vmatpush.bf16.msra.mxu0 %v48
  %92 = vmatmul.bf16.gmra.mxu0 %v56
  %v93 = vpop.f32.mrf.mxu0
  %v94 = vadd.f32 0.0, %v93
  %v95 = vpop.f32.mrf.mxu0
  %96 = vdwg.mxu0
  %97 = vmatpush.bf16.msra.mxu0 0
  %98 = vmatpush.bf16.msra.mxu0 0
  %99 = vmatpush.bf16.msra.mxu0 0
  %100 = vmatpush.bf16.msra.mxu0 0
  %101 = vmatpush.bf16.msra.mxu0 0
  %102 = vmatpush.bf16.msra.mxu0 0
  %103 = vmatpush.bf16.msra.mxu0 0
  %104 = vmatpush.bf16.msra.mxu0 %v49
  %105 = vmatmul.bf16.gmra.mxu0 %v56
  %v106 = vpop.f32.mrf.mxu0
  %v107 = vadd.f32 0.0, %v106
  %v108 = vpop.f32.mrf.mxu0
  %109 = vdwg.mxu0
  %110 = vst [vmem:[%s4] sm:$0xff] %v68
  %111 = vst [vmem:[%s4 + $0x8] sm:$0xff] %v81
  %112 = vst [vmem:[%s4 + $0x10] sm:$0xff] %v94
  %113 = vst [vmem:[%s4 + $0x18] sm:$0xff] %v107
  // Predicated region
  $region18: #{generator_forward.4} parent=0 // pred_check
    _
  $region19: #{generator_forward.4} parent=0 // pred_check_branch
    %115 = sbr.rel (0) target = $region21
  $region20: #{generator_forward.4} parent=0 // pred_region
    _
  $region21: #{generator_forward.4} parent=0 // pred_fallthru
    _
  // Predicated region
  $region22: #{generator_forward.4} parent=0 // pred_check
    _
  $region23: #{generator_forward.4} parent=0 // pred_check_branch
    %117 = sbr.rel (0) target = $region25
  $region24: #{generator_forward.4} parent=0 // pred_region
    _
  $region25: #{generator_forward.4} parent=0 // pred_fallthru
    _

// kernel: generator_forward.5
$region0: #{generator_forward.5}
  #allocation0 [shape = 'u32[]', space=smem, size = 0x4, offset = 0x4, fixed_abs, tag = 'smem constant byte address 0x4 - core index']
  #allocation1 [shape = 'u32[72,128]{1,0:T(1,128)}', space=vmem, size = 0x9000, scoped, tag = 'internal scratch']
  %s0 = inlined_call_operand.vmem [shape: f32[32,32], index: 0, kind: input, shape index: {}]
  %s1 = inlined_call_operand.vmem [shape: bf16[32,256], index: 1, kind: input, shape index: {}]
  %s2 = inlined_call_operand.vmem [shape: f32[1,32], index: 2, kind: input, shape index: {}]
  %s3 = inlined_call_operand.vmem [shape: f32[1,32], index: 3, kind: input, shape index: {}]
  %s4 = inlined_call_operand.vmem [shape: f32[32,256], index: 4, kind: output, shape index: {}]
  %s5 = sld [smem:[#allocation0]]
  $region26: #{generator_forward.5} parent=0
    _
  %s7 = ssub.s32 1, %s5
  %s8 = scalar_select 0, %s7, %s5
  // Predicated region
  $region2: #{generator_forward.5} parent=0 // pred_check
    _
  $region3: #{generator_forward.5} parent=0 // pred_check_branch
    %10 = sbr.rel (0) target = $region5
  $region4: #{generator_forward.5} parent=0 // pred_region
    _
  $region5: #{generator_forward.5} parent=0 // pred_fallthru
    _
  // Predicated region
  $region6: #{generator_forward.5} parent=0 // pred_check
    _
  $region7: #{generator_forward.5} parent=0 // pred_check_branch
    %12 = sbr.rel (0) target = $region9
  $region8: #{generator_forward.5} parent=0 // pred_region
    _
  $region9: #{generator_forward.5} parent=0 // pred_fallthru
    _
  // Predicated region
  $region10: #{generator_forward.5} parent=0 // pred_check
    _
  $region11: #{generator_forward.5} parent=0 // pred_check_branch
    %14 = sbr.rel (0) target = $region13
  $region12: #{generator_forward.5} parent=0 // pred_region
    _
  $region13: #{generator_forward.5} parent=0 // pred_fallthru
    _
  // Predicated region
  $region14: #{generator_forward.5} parent=0 // pred_check
    _
  $region15: #{generator_forward.5} parent=0 // pred_check_branch
    %16 = sbr.rel (0) target = $region17
  $region16: #{generator_forward.5} parent=0 // pred_region
    _
  $region17: #{generator_forward.5} parent=0 // pred_fallthru
    _
  %v18 = vld [vmem:[%s0] sm:$0xff]
  %v19 = vld [vmem:[%s0 + $0x8] sm:$0xff]
  %v20 = vld [vmem:[%s0 + $0x10] sm:$0xff]
  %v21 = vld [vmem:[%s0 + $0x18] sm:$0xff]
  %v22 = vld [vmem:[%s2] sm:$0x1]
  %v24 = vperm.slane %v22, 0
  %v26 = vmul.f32 %v18, %v24
  %v27 = vmul.f32 %v19, %v24
  %v28 = vmul.f32 %v20, %v24
  %v29 = vmul.f32 %v21, %v24
  %v30 = vld [vmem:[%s3] sm:$0x1]
  %v32 = vperm.slane %v30, 0
  %v34 = vadd.f32 %v26, %v32
  %v35 = vadd.f32 %v27, %v32
  %v36 = vadd.f32 %v28, %v32
  %v37 = vadd.f32 %v29, %v32
  %v38 = vmul.f32 %v34, 0.2
  %v39 = vmul.f32 %v35, 0.2
  %v40 = vmul.f32 %v36, 0.2
  %v41 = vmul.f32 %v37, 0.2
  %v42 = vmax.f32 %v34, %v38
  %v43 = vmax.f32 %v35, %v39
  %v44 = vmax.f32 %v36, %v40
  %v45 = vmax.f32 %v37, %v41
  %v46 = vpack.c.bf16 %v43, %v42
  %v47 = vpack.c.bf16 %v45, %v44
  %v48 = vld [vmem:[%s1] sm:$0xff]
  %v49 = vld [vmem:[%s1 + $0x8] sm:$0xff]
  %v50 = vld [vmem:[%s1 + $0x10] sm:$0xff]
  %v51 = vld [vmem:[%s1 + $0x18] sm:$0xff]
  %v56 = vunpack.c.l.b16 %v48
  %v57 = vunpack.c.h.b16 %v48
  %v58 = vunpack.c.l.b16 %v49
  %v59 = vunpack.c.h.b16 %v49
  %v60 = vunpack.c.l.b16 %v50
  %v61 = vunpack.c.h.b16 %v50
  %v62 = vunpack.c.l.b16 %v51
  %v63 = vunpack.c.h.b16 %v51
  %v64 = vpack.c.b16 %v58, %v56
  %v65 = vpack.c.b16 %v59, %v57
  %v66 = vpack.c.b16 %v62, %v60
  %v67 = vpack.c.b16 %v63, %v61
  %vm72 = vcmask 261120
  %v74 = vsel %vm72, %v46, 0
  %v77 = vsel %vm72, %v47, 0
  %79 = vmatpush.bf16.msra.mxu0 0
  %80 = vmatpush.bf16.msra.mxu0 0
  %81 = vmatpush.bf16.msra.mxu0 0
  %82 = vmatpush.bf16.msra.mxu0 0
  %83 = vmatpush.bf16.msra.mxu0 0
  %84 = vmatpush.bf16.msra.mxu0 0
  %85 = vmatpush.bf16.msra.mxu0 %v66
  %86 = vmatpush.bf16.msra.mxu0 %v64
  %87 = vmatmul.bf16.gmra.mxu0 %v74
  %v88 = vpop.f32.mrf.mxu0
  %v89 = vadd.f32 0.0, %v88
  %v90 = vpop.f32.mrf.mxu0
  %v91 = vadd.f32 0.0, %v90
  %92 = vmatmul.bf16.gmra.mxu0 %v77
  %v93 = vpop.f32.mrf.mxu0
  %v94 = vadd.f32 0.0, %v93
  %v95 = vpop.f32.mrf.mxu0
  %v96 = vadd.f32 0.0, %v95
  %97 = vdwg.mxu0
  %98 = vmatpush.bf16.msra.mxu0 0
  %99 = vmatpush.bf16.msra.mxu0 0
  %100 = vmatpush.bf16.msra.mxu0 0
  %101 = vmatpush.bf16.msra.mxu0 0
  %102 = vmatpush.bf16.msra.mxu0 0
  %103 = vmatpush.bf16.msra.mxu0 0
  %104 = vmatpush.bf16.msra.mxu0 %v67
  %105 = vmatpush.bf16.msra.mxu0 %v65
  %106 = vmatmul.bf16.gmra.mxu0 %v74
  %v107 = vpop.f32.mrf.mxu0
  %v108 = vadd.f32 0.0, %v107
  %v109 = vpop.f32.mrf.mxu0
  %v110 = vadd.f32 0.0, %v109
  %111 = vmatmul.bf16.gmra.mxu0 %v77
  %v112 = vpop.f32.mrf.mxu0
  %v113 = vadd.f32 0.0, %v112
  %v114 = vpop.f32.mrf.mxu0
  %v115 = vadd.f32 0.0, %v114
  %116 = vdwg.mxu0
  %117 = vst [vmem:[%s4] sm:$0xff] %v89
  %118 = vst [vmem:[%s4 + $0x8] sm:$0xff] %v108
  %119 = vst [vmem:[%s4 + $0x10] sm:$0xff] %v91
  %120 = vst [vmem:[%s4 + $0x18] sm:$0xff] %v110
  %121 = vst [vmem:[%s4 + $0x20] sm:$0xff] %v94
  %122 = vst [vmem:[%s4 + $0x28] sm:$0xff] %v113
  %123 = vst [vmem:[%s4 + $0x30] sm:$0xff] %v96
  %124 = vst [vmem:[%s4 + $0x38] sm:$0xff] %v115
  // Predicated region
  $region18: #{generator_forward.5} parent=0 // pred_check
    _
  $region19: #{generator_forward.5} parent=0 // pred_check_branch
    %126 = sbr.rel (0) target = $region21
  $region20: #{generator_forward.5} parent=0 // pred_region
    _
  $region21: #{generator_forward.5} parent=0 // pred_fallthru
    _
  // Predicated region
  $region22: #{generator_forward.5} parent=0 // pred_check
    _
  $region23: #{generator_forward.5} parent=0 // pred_check_branch
    %128 = sbr.rel (0) target = $region25
  $region24: #{generator_forward.5} parent=0 // pred_region
    _
  $region25: #{generator_forward.5} parent=0 // pred_fallthru
    _

// kernel: generator_forward.6
$region0: #{generator_forward.6}
  #allocation0 [shape = 'u32[]', space=smem, size = 0x4, offset = 0x4, fixed_abs, tag = 'smem constant byte address 0x4 - core index']
  #allocation1 [shape = 'u32[72,128]{1,0:T(1,128)}', space=vmem, size = 0x9000, scoped, tag = 'internal scratch']
  %s0 = inlined_call_operand.vmem [shape: f32[128,16], index: 0, kind: input, shape index: {}]
  %s1 = inlined_call_operand.vmem [shape: bf16[16,128], index: 1, kind: input, shape index: {}]
  %s2 = inlined_call_operand.vmem [shape: f32[1,16], index: 2, kind: input, shape index: {}]
  %s3 = inlined_call_operand.vmem [shape: f32[1,16], index: 3, kind: input, shape index: {}]
  %s4 = inlined_call_operand.vmem [shape: f32[128,128], index: 4, kind: output, shape index: {}]
  %s5 = sld [smem:[#allocation0]]
  $region26: #{generator_forward.6} parent=0
    _
  %s7 = ssub.s32 1, %s5
  %s8 = scalar_select 0, %s7, %s5
  // Predicated region
  $region2: #{generator_forward.6} parent=0 // pred_check
    _
  $region3: #{generator_forward.6} parent=0 // pred_check_branch
    %10 = sbr.rel (0) target = $region5
  $region4: #{generator_forward.6} parent=0 // pred_region
    _
  $region5: #{generator_forward.6} parent=0 // pred_fallthru
    _
  // Predicated region
  $region6: #{generator_forward.6} parent=0 // pred_check
    _
  $region7: #{generator_forward.6} parent=0 // pred_check_branch
    %12 = sbr.rel (0) target = $region9
  $region8: #{generator_forward.6} parent=0 // pred_region
    _
  $region9: #{generator_forward.6} parent=0 // pred_fallthru
    _
  // Predicated region
  $region10: #{generator_forward.6} parent=0 // pred_check
    _
  $region11: #{generator_forward.6} parent=0 // pred_check_branch
    %14 = sbr.rel (0) target = $region13
  $region12: #{generator_forward.6} parent=0 // pred_region
    _
  $region13: #{generator_forward.6} parent=0 // pred_fallthru
    _
  // Predicated region
  $region14: #{generator_forward.6} parent=0 // pred_check
    _
  $region15: #{generator_forward.6} parent=0 // pred_check_branch
    %16 = sbr.rel (0) target = $region17
  $region16: #{generator_forward.6} parent=0 // pred_region
    _
  $region17: #{generator_forward.6} parent=0 // pred_fallthru
    _
  %v18 = vld [vmem:[%s0] sm:$0xff]
  %v19 = vld [vmem:[%s0 + $0x8] sm:$0xff]
  %v20 = vld [vmem:[%s0 + $0x10] sm:$0xff]
  %v21 = vld [vmem:[%s0 + $0x18] sm:$0xff]
  %v22 = vld [vmem:[%s0 + $0x20] sm:$0xff]
  %v23 = vld [vmem:[%s0 + $0x28] sm:$0xff]
  %v24 = vld [vmem:[%s0 + $0x30] sm:$0xff]
  %v25 = vld [vmem:[%s0 + $0x38] sm:$0xff]
  %v26 = vld [vmem:[%s0 + $0x40] sm:$0xff]
  %v27 = vld [vmem:[%s0 + $0x48] sm:$0xff]
  %v28 = vld [vmem:[%s0 + $0x50] sm:$0xff]
  %v29 = vld [vmem:[%s0 + $0x58] sm:$0xff]
  %v30 = vld [vmem:[%s0 + $0x60] sm:$0xff]
  %v31 = vld [vmem:[%s0 + $0x68] sm:$0xff]
  %v32 = vld [vmem:[%s0 + $0x70] sm:$0xff]
  %v33 = vld [vmem:[%s0 + $0x78] sm:$0xff]
  %v34 = vld [vmem:[%s2] sm:$0x1]
  %v36 = vperm.slane %v34, 0
  %v38 = vmul.f32 %v18, %v36
  %v39 = vmul.f32 %v19, %v36
  %v40 = vmul.f32 %v20, %v36
  %v41 = vmul.f32 %v21, %v36
  %v42 = vmul.f32 %v22, %v36
  %v43 = vmul.f32 %v23, %v36
  %v44 = vmul.f32 %v24, %v36
  %v45 = vmul.f32 %v25, %v36
  %v46 = vmul.f32 %v26, %v36
  %v47 = vmul.f32 %v27, %v36
  %v48 = vmul.f32 %v28, %v36
  %v49 = vmul.f32 %v29, %v36
  %v50 = vmul.f32 %v30, %v36
  %v51 = vmul.f32 %v31, %v36
  %v52 = vmul.f32 %v32, %v36
  %v53 = vmul.f32 %v33, %v36
  %v54 = vld [vmem:[%s3] sm:$0x1]
  %v56 = vperm.slane %v54, 0
  %v58 = vadd.f32 %v38, %v56
  %v59 = vadd.f32 %v39, %v56
  %v60 = vadd.f32 %v40, %v56
  %v61 = vadd.f32 %v41, %v56
  %v62 = vadd.f32 %v42, %v56
  %v63 = vadd.f32 %v43, %v56
  %v64 = vadd.f32 %v44, %v56
  %v65 = vadd.f32 %v45, %v56
  %v66 = vadd.f32 %v46, %v56
  %v67 = vadd.f32 %v47, %v56
  %v68 = vadd.f32 %v48, %v56
  %v69 = vadd.f32 %v49, %v56
  %v70 = vadd.f32 %v50, %v56
  %v71 = vadd.f32 %v51, %v56
  %v72 = vadd.f32 %v52, %v56
  %v73 = vadd.f32 %v53, %v56
  %v74 = vmul.f32 %v58, 0.2
  %v75 = vmul.f32 %v59, 0.2
  %v76 = vmul.f32 %v60, 0.2
  %v77 = vmul.f32 %v61, 0.2
  %v78 = vmul.f32 %v62, 0.2
  %v79 = vmul.f32 %v63, 0.2
  %v80 = vmul.f32 %v64, 0.2
  %v81 = vmul.f32 %v65, 0.2
  %v82 = vmul.f32 %v66, 0.2
  %v83 = vmul.f32 %v67, 0.2
  %v84 = vmul.f32 %v68, 0.2
  %v85 = vmul.f32 %v69, 0.2
  %v86 = vmul.f32 %v70, 0.2
  %v87 = vmul.f32 %v71, 0.2
  %v88 = vmul.f32 %v72, 0.2
  %v89 = vmul.f32 %v73, 0.2
  %v90 = vmax.f32 %v58, %v74
  %v91 = vmax.f32 %v59, %v75
  %v92 = vmax.f32 %v60, %v76
  %v93 = vmax.f32 %v61, %v77
  %v94 = vmax.f32 %v62, %v78
  %v95 = vmax.f32 %v63, %v79
  %v96 = vmax.f32 %v64, %v80
  %v97 = vmax.f32 %v65, %v81
  %v98 = vmax.f32 %v66, %v82
  %v99 = vmax.f32 %v67, %v83
  %v100 = vmax.f32 %v68, %v84
  %v101 = vmax.f32 %v69, %v85
  %v102 = vmax.f32 %v70, %v86
  %v103 = vmax.f32 %v71, %v87
  %v104 = vmax.f32 %v72, %v88
  %v105 = vmax.f32 %v73, %v89
  %v106 = vpack.c.bf16 %v91, %v90
  %v107 = vpack.c.bf16 %v93, %v92
  %v108 = vpack.c.bf16 %v95, %v94
  %v109 = vpack.c.bf16 %v97, %v96
  %v110 = vpack.c.bf16 %v99, %v98
  %v111 = vpack.c.bf16 %v101, %v100
  %v112 = vpack.c.bf16 %v103, %v102
  %v113 = vpack.c.bf16 %v105, %v104
  %v114 = vld [vmem:[%s1] sm:$0xf]
  %v115 = vld [vmem:[%s1 + $0x4] sm:$0xf]
  %v118 = vunpack.c.l.b16 %v114
  %v119 = vunpack.c.l.b16 %v115
  %v120 = vpack.c.b16 %v119, %v118
  %vm122 = vcmask 130048
  %v124 = vsel %vm122, %v106, 0
  %v127 = vsel %vm122, %v107, 0
  %v130 = vsel %vm122, %v108, 0
  %v133 = vsel %vm122, %v109, 0
  %v136 = vsel %vm122, %v110, 0
  %v139 = vsel %vm122, %v111, 0
  %v142 = vsel %vm122, %v112, 0
  %v145 = vsel %vm122, %v113, 0
  %147 = vmatpush.bf16.msra.mxu0 0
  %148 = vmatpush.bf16.msra.mxu0 0
  %149 = vmatpush.bf16.msra.mxu0 0
  %150 = vmatpush.bf16.msra.mxu0 0
  %151 = vmatpush.bf16.msra.mxu0 0
  %152 = vmatpush.bf16.msra.mxu0 0
  %153 = vmatpush.bf16.msra.mxu0 0
  %154 = vmatpush.bf16.msra.mxu0 %v120
  %155 = vmatmul.bf16.gmra.mxu0 %v124
  %v156 = vpop.f32.mrf.mxu0
  %v157 = vadd.f32 0.0, %v156
  %v158 = vpop.f32.mrf.mxu0
  %v159 = vadd.f32 0.0, %v158
  %160 = vmatmul.bf16.gmra.mxu0 %v127
  %v161 = vpop.f32.mrf.mxu0
  %v162 = vadd.f32 0.0, %v161
  %v163 = vpop.f32.mrf.mxu0
  %v164 = vadd.f32 0.0, %v163
  %165 = vmatmul.bf16.gmra.mxu0 %v130
  %v166 = vpop.f32.mrf.mxu0
  %v167 = vadd.f32 0.0, %v166
  %v168 = vpop.f32.mrf.mxu0
  %v169 = vadd.f32 0.0, %v168
  %170 = vmatmul.bf16.gmra.mxu0 %v133
  %v171 = vpop.f32.mrf.mxu0
  %v172 = vadd.f32 0.0, %v171
  %v173 = vpop.f32.mrf.mxu0
  %v174 = vadd.f32 0.0, %v173
  %175 = vmatmul.bf16.gmra.mxu0 %v136
  %v176 = vpop.f32.mrf.mxu0
  %v177 = vadd.f32 0.0, %v176
  %v178 = vpop.f32.mrf.mxu0
  %v179 = vadd.f32 0.0, %v178
  %180 = vmatmul.bf16.gmra.mxu0 %v139
  %v181 = vpop.f32.mrf.mxu0
  %v182 = vadd.f32 0.0, %v181
  %v183 = vpop.f32.mrf.mxu0
  %v184 = vadd.f32 0.0, %v183
  %185 = vmatmul.bf16.gmra.mxu0 %v142
  %v186 = vpop.f32.mrf.mxu0
  %v187 = vadd.f32 0.0, %v186
  %v188 = vpop.f32.mrf.mxu0
  %v189 = vadd.f32 0.0, %v188
  %190 = vmatmul.bf16.gmra.mxu0 %v145
  %v191 = vpop.f32.mrf.mxu0
  %v192 = vadd.f32 0.0, %v191
  %v193 = vpop.f32.mrf.mxu0
  %v194 = vadd.f32 0.0, %v193
  %195 = vdwg.mxu0
  %196 = vst [vmem:[%s4] sm:$0xff] %v157
  %197 = vst [vmem:[%s4 + $0x8] sm:$0xff] %v159
  %198 = vst [vmem:[%s4 + $0x10] sm:$0xff] %v162
  %199 = vst [vmem:[%s4 + $0x18] sm:$0xff] %v164
  %200 = vst [vmem:[%s4 + $0x20] sm:$0xff] %v167
  %201 = vst [vmem:[%s4 + $0x28] sm:$0xff] %v169
  %202 = vst [vmem:[%s4 + $0x30] sm:$0xff] %v172
  %203 = vst [vmem:[%s4 + $0x38] sm:$0xff] %v174
  %204 = vst [vmem:[%s4 + $0x40] sm:$0xff] %v177
  %205 = vst [vmem:[%s4 + $0x48] sm:$0xff] %v179
  %206 = vst [vmem:[%s4 + $0x50] sm:$0xff] %v182
  %207 = vst [vmem:[%s4 + $0x58] sm:$0xff] %v184
  %208 = vst [vmem:[%s4 + $0x60] sm:$0xff] %v187
  %209 = vst [vmem:[%s4 + $0x68] sm:$0xff] %v189
  %210 = vst [vmem:[%s4 + $0x70] sm:$0xff] %v192
  %211 = vst [vmem:[%s4 + $0x78] sm:$0xff] %v194
  // Predicated region
  $region18: #{generator_forward.6} parent=0 // pred_check
    _
  $region19: #{generator_forward.6} parent=0 // pred_check_branch
    %213 = sbr.rel (0) target = $region21
  $region20: #{generator_forward.6} parent=0 // pred_region
    _
  $region21: #{generator_forward.6} parent=0 // pred_fallthru
    _
  // Predicated region
  $region22: #{generator_forward.6} parent=0 // pred_check
    _
  $region23: #{generator_forward.6} parent=0 // pred_check_branch
    %215 = sbr.rel (0) target = $region25
  $region24: #{generator_forward.6} parent=0 // pred_region
    _
  $region25: #{generator_forward.6} parent=0 // pred_fallthru
    _

// kernel: generator_forward.7
$region0: #{generator_forward.7}
  #allocation0 [shape = 'u32[]', space=smem, size = 0x4, offset = 0x4, fixed_abs, tag = 'smem constant byte address 0x4 - core index']
  #allocation1 [shape = 'u32[72,128]{1,0:T(1,128)}', space=vmem, size = 0x9000, scoped, tag = 'internal scratch']
  %s0 = inlined_call_operand.vmem [shape: f32[512,8], index: 0, kind: input, shape index: {}]
  %s1 = inlined_call_operand.vmem [shape: bf16[8,128], index: 1, kind: input, shape index: {}]
  %s2 = inlined_call_operand.vmem [shape: f32[1,8], index: 2, kind: input, shape index: {}]
  %s3 = inlined_call_operand.vmem [shape: f32[1,8], index: 3, kind: input, shape index: {}]
  %s4 = inlined_call_operand.vmem [shape: f32[512,128], index: 4, kind: output, shape index: {}]
  %s5 = sld [smem:[#allocation0]]
  $region49: #{generator_forward.7} parent=0
    _
  %s7 = ssub.s32 1, %s5
  %s8 = scalar_select 0, %s7, %s5
  loop: start=0, step=1, limit=4
  $region2: #{generator_forward.7} parent=0 // loop_pre_header
    _
  $region3: #{generator_forward.7} parent=0 // loop_header
    %s10 = sphi 0, %s14
    %p11 = scmp.ge.s32.totalorder %s10, 4
    %s20 = sphi 0, %s22
    %s23 = sphi 0, %s20
    %s24 = sphi 0, %s23
    %s40 = sphi 0, %s24
    %s44 = sphi 0, %s44
    %s46 = sphi 0, %s44
    %s47 = sphi 0, %s46
    %s61 = sphi 0, %s47
    %s65 = sphi 0, %s65
    %s67 = sphi 0, %s65
    %s68 = sphi 0, %s67
    %s82 = sphi 0, %s68
    %s86 = sphi 0, %s86
    %s88 = sphi 0, %s86
    %s89 = sphi 0, %s88
    %s103 = sphi 0, %s89
    %s109 = sphi 0, %s111
    %s112 = sphi 0, %s109
    %s113 = sphi 0, %s112
    %s129 = sphi 0, %s113
  $region4: #{generator_forward.7} parent=0 // loop_header_branch
    %13 = sbr.rel (%p11) target = $region8
  $region5: #{generator_forward.7} parent=0 // loop_body
    %s15 = ssub.s32 %s10, 1
    %s16 = ssub.s32 %s10, 2
    %s17 = sadd.s32 %s10, 1
    %s18 = ssub.s32 %s10, %s17
    %p19 = scmp.eq.s32.totalorder %s18, 0
    %s21 = sadd.s32 %s20, 1
    %s22 = scalar_select %p19, %s20, %s21
    %p25 = pneg %p19
    %p26 = scmp.eq.s32.totalorder %s10, 1
    %p27 = por %p25, %p26
    %p28 = scmp.ne.s32.totalorder %s20, %s23
    %p29 = scmp.eq.s32.totalorder %s10, 0
    %p30 = por %p28, %p29
    %p31 = scmp.ne.s32.totalorder %s20, %s23
    %p32 = scmp.eq.s32.totalorder %s15, 1
    %p33 = por %p31, %p32
    %p34 = scmp.ne.s32.totalorder %s23, %s24
    %p35 = scmp.eq.s32.totalorder %s15, 0
    %p36 = por %p34, %p35
    %p37 = scmp.ne.s32.totalorder %s23, %s24
    %p38 = scmp.eq.s32.totalorder %s16, 1
    %p39 = por %p37, %p38
    %p41 = scmp.ne.s32.totalorder %s24, %s40
    %p42 = scmp.eq.s32.totalorder %s16, 0
    %p43 = por %p41, %p42
    %s45 = sadd.s32 %s44, 1
    %p48 = scmp.eq.s32.totalorder %s10, 1
    %p49 = scmp.ne.s32.totalorder %s44, %s46
    %p50 = scmp.eq.s32.totalorder %s10, 0
    %p51 = por %p49, %p50
    %p52 = scmp.ne.s32.totalorder %s44, %s46
    %p53 = scmp.eq.s32.totalorder %s15, 1
    %p54 = por %p52, %p53
    %p55 = scmp.ne.s32.totalorder %s46, %s47
    %p56 = scmp.eq.s32.totalorder %s15, 0
    %p57 = por %p55, %p56
    %p58 = scmp.ne.s32.totalorder %s46, %s47
    %p59 = scmp.eq.s32.totalorder %s16, 1
    %p60 = por %p58, %p59
    %p62 = scmp.ne.s32.totalorder %s47, %s61
    %p63 = scmp.eq.s32.totalorder %s16, 0
    %p64 = por %p62, %p63
    %s66 = sadd.s32 %s65, 1
    %p69 = scmp.eq.s32.totalorder %s10, 1
    %p70 = scmp.ne.s32.totalorder %s65, %s67
    %p71 = scmp.eq.s32.totalorder %s10, 0
    %p72 = por %p70, %p71
    %p73 = scmp.ne.s32.totalorder %s65, %s67
    %p74 = scmp.eq.s32.totalorder %s15, 1
    %p75 = por %p73, %p74
    %p76 = scmp.ne.s32.totalorder %s67, %s68
    %p77 = scmp.eq.s32.totalorder %s15, 0
    %p78 = por %p76, %p77
    %p79 = scmp.ne.s32.totalorder %s67, %s68
    %p80 = scmp.eq.s32.totalorder %s16, 1
    %p81 = por %p79, %p80
    %p83 = scmp.ne.s32.totalorder %s68, %s82
    %p84 = scmp.eq.s32.totalorder %s16, 0
    %p85 = por %p83, %p84
    %s87 = sadd.s32 %s86, 1
    %p90 = scmp.eq.s32.totalorder %s10, 1
    %p91 = scmp.ne.s32.totalorder %s86, %s88
    %p92 = scmp.eq.s32.totalorder %s10, 0
    %p93 = por %p91, %p92
    %p94 = scmp.ne.s32.totalorder %s86, %s88
    %p95 = scmp.eq.s32.totalorder %s15, 1
    %p96 = por %p94, %p95
    %p97 = scmp.ne.s32.totalorder %s88, %s89
    %p98 = scmp.eq.s32.totalorder %s15, 0
    %p99 = por %p97, %p98
    %p100 = scmp.ne.s32.totalorder %s88, %s89
    %p101 = scmp.eq.s32.totalorder %s16, 1
    %p102 = por %p100, %p101
    %p104 = scmp.ne.s32.totalorder %s89, %s103
    %p105 = scmp.eq.s32.totalorder %s16, 0
    %p106 = por %p104, %p105
    %s107 = ssub.s32 %s10, %s17
    %p108 = scmp.eq.s32.totalorder %s107, 0
    %s110 = sadd.s32 %s109, 1
    %s111 = scalar_select %p108, %s109, %s110
    %p114 = pneg %p108
    %p115 = scmp.eq.s32.totalorder %s10, 1
    %p116 = por %p114, %p115
    %p117 = scmp.ne.s32.totalorder %s109, %s112
    %p118 = scmp.eq.s32.totalorder %s10, 0
    %p119 = por %p117, %p118
    %p120 = scmp.ne.s32.totalorder %s109, %s112
    %p121 = scmp.eq.s32.totalorder %s15, 1
    %p122 = por %p120, %p121
    %p123 = scmp.ne.s32.totalorder %s112, %s113
    %p124 = scmp.eq.s32.totalorder %s15, 0
    %p125 = por %p123, %p124
    %p126 = scmp.ne.s32.totalorder %s112, %s113
    %p127 = scmp.eq.s32.totalorder %s16, 1
    %p128 = por %p126, %p127
    %p130 = scmp.ne.s32.totalorder %s113, %s129
    %p131 = scmp.eq.s32.totalorder %s16, 0
    %p132 = por %p130, %p131
    %p133 = scmp.le.s32.totalorder 1, %s10
    %p134 = scmp.lt.s32.totalorder %s10, 3
    %p135 = pnand %p133, %p134
    %p136 = pneg %p135
    // Predicated region
    $region9: #{generator_forward.7} parent=5 // pred_check
      _
    $region10: #{generator_forward.7} parent=5 // pred_check_branch
      %138 = sbr.rel (%p135) target = $region12
    $region11: #{generator_forward.7} parent=5 // pred_region
      %s139 = ssub.s32 %s10, 1
      // Predicated region
      $region13: #{generator_forward.7} parent=11 // pred_check
        %p140 = pneg %p57
      $region14: #{generator_forward.7} parent=11 // pred_check_branch
        %142 = sbr.rel (%p140) target = $region16
      $region15: #{generator_forward.7} parent=11 // pred_region
        _
      $region16: #{generator_forward.7} parent=11 // pred_fallthru
        _
      // Predicated region
      $region17: #{generator_forward.7} parent=11 // pred_check
        %p143 = pneg %p78
      $region18: #{generator_forward.7} parent=11 // pred_check_branch
        %145 = sbr.rel (%p143) target = $region20
      $region19: #{generator_forward.7} parent=11 // pred_region
        _
      $region20: #{generator_forward.7} parent=11 // pred_fallthru
        _
      // Predicated region
      $region21: #{generator_forward.7} parent=11 // pred_check
        %p146 = pneg %p99
      $region22: #{generator_forward.7} parent=11 // pred_check_branch
        %148 = sbr.rel (%p146) target = $region24
      $region23: #{generator_forward.7} parent=11 // pred_region
        _
      $region24: #{generator_forward.7} parent=11 // pred_fallthru
        _
    $region12: #{generator_forward.7} parent=5 // pred_fallthru
      _
    %p149 = scmp.lt.s32.totalorder %s10, 2
    // Predicated region
    $region25: #{generator_forward.7} parent=5 // pred_check
      %p150 = pneg %p149
    $region26: #{generator_forward.7} parent=5 // pred_check_branch
      %152 = sbr.rel (%p150) target = $region28
    $region27: #{generator_forward.7} parent=5 // pred_region
      // Predicated region
      $region29: #{generator_forward.7} parent=27 // pred_check
        %p153 = pneg %p30
      $region30: #{generator_forward.7} parent=27 // pred_check_branch
        %155 = sbr.rel (%p153) target = $region32
      $region31: #{generator_forward.7} parent=27 // pred_region
        %s156 = smul.u32 32, %s10
        %p157 = scmp.lt.s32.totalorder %s156, 63
        %s158 = scalar_select %p157, %s156, 63
        %s159 = smul.addr %s158, 8
        %s160 = scalar_lea.vmem %s0, %s159
        %s161 = smul.u32 32, %s10
      $region32: #{generator_forward.7} parent=27 // pred_fallthru
        _
    $region28: #{generator_forward.7} parent=5 // pred_fallthru
      _
    %p162 = scmp.le.s32.totalorder 1, %s10
    %p163 = scmp.lt.s32.totalorder %s10, 3
    %p164 = pnand %p162, %p163
    %p165 = pneg %p164
    // Predicated region
    $region33: #{generator_forward.7} parent=5 // pred_check
      _
    $region34: #{generator_forward.7} parent=5 // pred_check_branch
      %167 = sbr.rel (%p164) target = $region36
    $region35: #{generator_forward.7} parent=5 // pred_region
      %s168 = ssub.s32 %s10, 1
      %s169 = smul.u32 32, %s15
      %p170 = scmp.lt.s32.totalorder %s169, 63
      %s171 = scalar_select %p170, %s169, 63
      %s172 = smul.addr %s171, 8
      %s173 = scalar_lea.vmem %s0, %s172
      %p174 = pneg %p36
      %p175 = pneg %p33
      %p176 = pneg %p57
      %p177 = pneg %p54
      %p178 = pneg %p78
      %p179 = pneg %p75
      %p180 = pneg %p99
      %p181 = pneg %p96
      %p182 = pneg %p125
      %p183 = pneg %p122
      %s184 = smul.u32 32, %s15
      %p185 = scmp.lt.s32.totalorder %s184, 63
      %s186 = scalar_select %p185, %s184, 63
      %s187 = smul.addr %s186, 8
      %s188 = scalar_lea.vmem %s4, %s187
      %s189 = smul.u32 32, %s15
      %p190 = scmp.lt.s32.totalorder %s189, 63
      %s191 = scalar_select %p190, %s189, 63
      %s192 = smul.addr %s191, 8
      %s193 = scalar_lea.vmem %s0, %s192
      %s194 = smul.u32 32, %s15
      %s195 = smul.u32 32, %s15
      %p196 = scmp.lt.s32.totalorder %s195, 63
      %s197 = scalar_select %p196, %s195, 63
      %s198 = smul.addr %s197, 8
      %s199 = scalar_lea.vmem %s4, %s198
      %s200 = smul.u32 32, %s15
      %v202 = vld [vmem:[%s193] sm:$0xff]
      %v203 = vld [vmem:[%s193 + $0x8] sm:$0xff]
      %v204 = vld [vmem:[%s193 + $0x10] sm:$0xff]
      %v205 = vld [vmem:[%s193 + $0x18] sm:$0xff]
      %v206 = vld [vmem:[%s193 + $0x20] sm:$0xff]
      %v207 = vld [vmem:[%s193 + $0x28] sm:$0xff]
      %v208 = vld [vmem:[%s193 + $0x30] sm:$0xff]
      %v209 = vld [vmem:[%s193 + $0x38] sm:$0xff]
      %v210 = vld [vmem:[%s193 + $0x40] sm:$0xff]
      %v211 = vld [vmem:[%s193 + $0x48] sm:$0xff]
      %v212 = vld [vmem:[%s193 + $0x50] sm:$0xff]
      %v213 = vld [vmem:[%s193 + $0x58] sm:$0xff]
      %v214 = vld [vmem:[%s193 + $0x60] sm:$0xff]
      %v215 = vld [vmem:[%s193 + $0x68] sm:$0xff]
      %v216 = vld [vmem:[%s193 + $0x70] sm:$0xff]
      %v217 = vld [vmem:[%s193 + $0x78] sm:$0xff]
      %v218 = vld [vmem:[%s193 + $0x80] sm:$0xff]
      %v219 = vld [vmem:[%s193 + $0x88] sm:$0xff]
      %v220 = vld [vmem:[%s193 + $0x90] sm:$0xff]
      %v221 = vld [vmem:[%s193 + $0x98] sm:$0xff]
      %v222 = vld [vmem:[%s193 + $0xa0] sm:$0xff]
      %v223 = vld [vmem:[%s193 + $0xa8] sm:$0xff]
      %v224 = vld [vmem:[%s193 + $0xb0] sm:$0xff]
      %v225 = vld [vmem:[%s193 + $0xb8] sm:$0xff]
      %v226 = vld [vmem:[%s193 + $0xc0] sm:$0xff]
      %v227 = vld [vmem:[%s193 + $0xc8] sm:$0xff]
      %v228 = vld [vmem:[%s193 + $0xd0] sm:$0xff]
      %v229 = vld [vmem:[%s193 + $0xd8] sm:$0xff]
      %v230 = vld [vmem:[%s193 + $0xe0] sm:$0xff]
      %v231 = vld [vmem:[%s193 + $0xe8] sm:$0xff]
      %v232 = vld [vmem:[%s193 + $0xf0] sm:$0xff]
      %v233 = vld [vmem:[%s193 + $0xf8] sm:$0xff]
      %v234 = vld [vmem:[%s2] sm:$0x1]
      %v236 = vperm.slane %v234, 0
      %v238 = vmul.f32 %v202, %v236
      %v239 = vmul.f32 %v203, %v236
      %v240 = vmul.f32 %v204, %v236
      %v241 = vmul.f32 %v205, %v236
      %v242 = vmul.f32 %v206, %v236
      %v243 = vmul.f32 %v207, %v236
      %v244 = vmul.f32 %v208, %v236
      %v245 = vmul.f32 %v209, %v236
      %v246 = vmul.f32 %v210, %v236
      %v247 = vmul.f32 %v211, %v236
      %v248 = vmul.f32 %v212, %v236
      %v249 = vmul.f32 %v213, %v236
      %v250 = vmul.f32 %v214, %v236
      %v251 = vmul.f32 %v215, %v236
      %v252 = vmul.f32 %v216, %v236
      %v253 = vmul.f32 %v217, %v236
      %v254 = vmul.f32 %v218, %v236
      %v255 = vmul.f32 %v219, %v236
      %v256 = vmul.f32 %v220, %v236
      %v257 = vmul.f32 %v221, %v236
      %v258 = vmul.f32 %v222, %v236
      %v259 = vmul.f32 %v223, %v236
      %v260 = vmul.f32 %v224, %v236
      %v261 = vmul.f32 %v225, %v236
      %v262 = vmul.f32 %v226, %v236
      %v263 = vmul.f32 %v227, %v236
      %v264 = vmul.f32 %v228, %v236
      %v265 = vmul.f32 %v229, %v236
      %v266 = vmul.f32 %v230, %v236
      %v267 = vmul.f32 %v231, %v236
      %v268 = vmul.f32 %v232, %v236
      %v269 = vmul.f32 %v233, %v236
      %v270 = vld [vmem:[%s3] sm:$0x1]
      %v272 = vperm.slane %v270, 0
      %v274 = vadd.f32 %v238, %v272
      %v275 = vadd.f32 %v239, %v272
      %v276 = vadd.f32 %v240, %v272
      %v277 = vadd.f32 %v241, %v272
      %v278 = vadd.f32 %v242, %v272
      %v279 = vadd.f32 %v243, %v272
      %v280 = vadd.f32 %v244, %v272
      %v281 = vadd.f32 %v245, %v272
      %v282 = vadd.f32 %v246, %v272
      %v283 = vadd.f32 %v247, %v272
      %v284 = vadd.f32 %v248, %v272
      %v285 = vadd.f32 %v249, %v272
      %v286 = vadd.f32 %v250, %v272
      %v287 = vadd.f32 %v251, %v272
      %v288 = vadd.f32 %v252, %v272
      %v289 = vadd.f32 %v253, %v272
      %v290 = vadd.f32 %v254, %v272
      %v291 = vadd.f32 %v255, %v272
      %v292 = vadd.f32 %v256, %v272
      %v293 = vadd.f32 %v257, %v272
      %v294 = vadd.f32 %v258, %v272
      %v295 = vadd.f32 %v259, %v272
      %v296 = vadd.f32 %v260, %v272
      %v297 = vadd.f32 %v261, %v272
      %v298 = vadd.f32 %v262, %v272
      %v299 = vadd.f32 %v263, %v272
      %v300 = vadd.f32 %v264, %v272
      %v301 = vadd.f32 %v265, %v272
      %v302 = vadd.f32 %v266, %v272
      %v303 = vadd.f32 %v267, %v272
      %v304 = vadd.f32 %v268, %v272
      %v305 = vadd.f32 %v269, %v272
      %v306 = vmul.f32 %v274, 0.2
      %v307 = vmul.f32 %v275, 0.2
      %v308 = vmul.f32 %v276, 0.2
      %v309 = vmul.f32 %v277, 0.2
      %v310 = vmul.f32 %v278, 0.2
      %v311 = vmul.f32 %v279, 0.2
      %v312 = vmul.f32 %v280, 0.2
      %v313 = vmul.f32 %v281, 0.2
      %v314 = vmul.f32 %v282, 0.2
      %v315 = vmul.f32 %v283, 0.2
      %v316 = vmul.f32 %v284, 0.2
      %v317 = vmul.f32 %v285, 0.2
      %v318 = vmul.f32 %v286, 0.2
      %v319 = vmul.f32 %v287, 0.2
      %v320 = vmul.f32 %v288, 0.2
      %v321 = vmul.f32 %v289, 0.2
      %v322 = vmul.f32 %v290, 0.2
      %v323 = vmul.f32 %v291, 0.2
      %v324 = vmul.f32 %v292, 0.2
      %v325 = vmul.f32 %v293, 0.2
      %v326 = vmul.f32 %v294, 0.2
      %v327 = vmul.f32 %v295, 0.2
      %v328 = vmul.f32 %v296, 0.2
      %v329 = vmul.f32 %v297, 0.2
      %v330 = vmul.f32 %v298, 0.2
      %v331 = vmul.f32 %v299, 0.2
      %v332 = vmul.f32 %v300, 0.2
      %v333 = vmul.f32 %v301, 0.2
      %v334 = vmul.f32 %v302, 0.2
      %v335 = vmul.f32 %v303, 0.2
      %v336 = vmul.f32 %v304, 0.2
      %v337 = vmul.f32 %v305, 0.2
      %v338 = vmax.f32 %v274, %v306
      %v339 = vmax.f32 %v275, %v307
      %v340 = vmax.f32 %v276, %v308
      %v341 = vmax.f32 %v277, %v309
      %v342 = vmax.f32 %v278, %v310
      %v343 = vmax.f32 %v279, %v311
      %v344 = vmax.f32 %v280, %v312
      %v345 = vmax.f32 %v281, %v313
      %v346 = vmax.f32 %v282, %v314
      %v347 = vmax.f32 %v283, %v315
      %v348 = vmax.f32 %v284, %v316
      %v349 = vmax.f32 %v285, %v317
      %v350 = vmax.f32 %v286, %v318
      %v351 = vmax.f32 %v287, %v319
      %v352 = vmax.f32 %v288, %v320
      %v353 = vmax.f32 %v289, %v321
      %v354 = vmax.f32 %v290, %v322
      %v355 = vmax.f32 %v291, %v323
      %v356 = vmax.f32 %v292, %v324
      %v357 = vmax.f32 %v293, %v325
      %v358 = vmax.f32 %v294, %v326
      %v359 = vmax.f32 %v295, %v327
      %v360 = vmax.f32 %v296, %v328
      %v361 = vmax.f32 %v297, %v329
      %v362 = vmax.f32 %v298, %v330
      %v363 = vmax.f32 %v299, %v331
      %v364 = vmax.f32 %v300, %v332
      %v365 = vmax.f32 %v301, %v333
      %v366 = vmax.f32 %v302, %v334
      %v367 = vmax.f32 %v303, %v335
      %v368 = vmax.f32 %v304, %v336
      %v369 = vmax.f32 %v305, %v337
      %v370 = vpack.c.bf16 %v339, %v338
      %v371 = vpack.c.bf16 %v341, %v340
      %v372 = vpack.c.bf16 %v343, %v342
      %v373 = vpack.c.bf16 %v345, %v344
      %v374 = vpack.c.bf16 %v347, %v346
      %v375 = vpack.c.bf16 %v349, %v348
      %v376 = vpack.c.bf16 %v351, %v350
      %v377 = vpack.c.bf16 %v353, %v352
      %v378 = vpack.c.bf16 %v355, %v354
      %v379 = vpack.c.bf16 %v357, %v356
      %v380 = vpack.c.bf16 %v359, %v358
      %v381 = vpack.c.bf16 %v361, %v360
      %v382 = vpack.c.bf16 %v363, %v362
      %v383 = vpack.c.bf16 %v365, %v364
      %v384 = vpack.c.bf16 %v367, %v366
      %v385 = vpack.c.bf16 %v369, %v368
      %v386 = vld [vmem:[%s1] sm:$0xf]
      %vm387 = vcmask 64512
      %v389 = vsel %vm387, %v370, 0
      %v392 = vsel %vm387, %v371, 0
      %v395 = vsel %vm387, %v372, 0
      %v398 = vsel %vm387, %v373, 0
      %v401 = vsel %vm387, %v374, 0
      %v404 = vsel %vm387, %v375, 0
      %v407 = vsel %vm387, %v376, 0
      %v410 = vsel %vm387, %v377, 0
      %v413 = vsel %vm387, %v378, 0
      %v416 = vsel %vm387, %v379, 0
      %v419 = vsel %vm387, %v380, 0
      %v422 = vsel %vm387, %v381, 0
      %v425 = vsel %vm387, %v382, 0
      %v428 = vsel %vm387, %v383, 0
      %v431 = vsel %vm387, %v384, 0
      %v434 = vsel %vm387, %v385, 0
      %vm436 = vcmask 1043456
      %v438 = vsel %vm436, %v386, 0
      %440 = vmatpush.bf16.msra.mxu0 0
      %441 = vmatpush.bf16.msra.mxu0 0
      %442 = vmatpush.bf16.msra.mxu0 0
      %443 = vmatpush.bf16.msra.mxu0 0
      %444 = vmatpush.bf16.msra.mxu0 0
      %445 = vmatpush.bf16.msra.mxu0 0
      %446 = vmatpush.bf16.msra.mxu0 0
      %447 = vmatpush.bf16.msra.mxu0 %v438
      %448 = vmatmul.bf16.gmra.mxu0 %v389
      %v449 = vpop.f32.mrf.mxu0
      %v450 = vadd.f32 0.0, %v449
      %v451 = vpop.f32.mrf.mxu0
      %v452 = vadd.f32 0.0, %v451
      %453 = vmatmul.bf16.gmra.mxu0 %v392
      %v454 = vpop.f32.mrf.mxu0
      %v455 = vadd.f32 0.0, %v454
      %v456 = vpop.f32.mrf.mxu0
      %v457 = vadd.f32 0.0, %v456
      %458 = vmatmul.bf16.gmra.mxu0 %v395
      %v459 = vpop.f32.mrf.mxu0
      %v460 = vadd.f32 0.0, %v459
      %v461 = vpop.f32.mrf.mxu0
      %v462 = vadd.f32 0.0, %v461
      %463 = vmatmul.bf16.gmra.mxu0 %v398
      %v464 = vpop.f32.mrf.mxu0
      %v465 = vadd.f32 0.0, %v464
      %v466 = vpop.f32.mrf.mxu0
      %v467 = vadd.f32 0.0, %v466
      %468 = vmatmul.bf16.gmra.mxu0 %v401
      %v469 = vpop.f32.mrf.mxu0
      %v470 = vadd.f32 0.0, %v469
      %v471 = vpop.f32.mrf.mxu0
      %v472 = vadd.f32 0.0, %v471
      %473 = vmatmul.bf16.gmra.mxu0 %v404
      %v474 = vpop.f32.mrf.mxu0
      %v475 = vadd.f32 0.0, %v474
      %v476 = vpop.f32.mrf.mxu0
      %v477 = vadd.f32 0.0, %v476
      %478 = vmatmul.bf16.gmra.mxu0 %v407
      %v479 = vpop.f32.mrf.mxu0
      %v480 = vadd.f32 0.0, %v479
      %v481 = vpop.f32.mrf.mxu0
      %v482 = vadd.f32 0.0, %v481
      %483 = vmatmul.bf16.gmra.mxu0 %v410
      %v484 = vpop.f32.mrf.mxu0
      %v485 = vadd.f32 0.0, %v484
      %v486 = vpop.f32.mrf.mxu0
      %v487 = vadd.f32 0.0, %v486
      %488 = vmatmul.bf16.gmra.mxu0 %v413
      %v489 = vpop.f32.mrf.mxu0
      %v490 = vadd.f32 0.0, %v489
      %v491 = vpop.f32.mrf.mxu0
      %v492 = vadd.f32 0.0, %v491
      %493 = vmatmul.bf16.gmra.mxu0 %v416
      %v494 = vpop.f32.mrf.mxu0
      %v495 = vadd.f32 0.0, %v494
      %v496 = vpop.f32.mrf.mxu0
      %v497 = vadd.f32 0.0, %v496
      %498 = vmatmul.bf16.gmra.mxu0 %v419
      %v499 = vpop.f32.mrf.mxu0
      %v500 = vadd.f32 0.0, %v499
      %v501 = vpop.f32.mrf.mxu0
      %v502 = vadd.f32 0.0, %v501
      %503 = vmatmul.bf16.gmra.mxu0 %v422
      %v504 = vpop.f32.mrf.mxu0
      %v505 = vadd.f32 0.0, %v504
      %v506 = vpop.f32.mrf.mxu0
      %v507 = vadd.f32 0.0, %v506
      %508 = vmatmul.bf16.gmra.mxu0 %v425
      %v509 = vpop.f32.mrf.mxu0
      %v510 = vadd.f32 0.0, %v509
      %v511 = vpop.f32.mrf.mxu0
      %v512 = vadd.f32 0.0, %v511
      %513 = vmatmul.bf16.gmra.mxu0 %v428
      %v514 = vpop.f32.mrf.mxu0
      %v515 = vadd.f32 0.0, %v514
      %v516 = vpop.f32.mrf.mxu0
      %v517 = vadd.f32 0.0, %v516
      %518 = vmatmul.bf16.gmra.mxu0 %v431
      %v519 = vpop.f32.mrf.mxu0
      %v520 = vadd.f32 0.0, %v519
      %v521 = vpop.f32.mrf.mxu0
      %v522 = vadd.f32 0.0, %v521
      %523 = vmatmul.bf16.gmra.mxu0 %v434
      %v524 = vpop.f32.mrf.mxu0
      %v525 = vadd.f32 0.0, %v524
      %v526 = vpop.f32.mrf.mxu0
      %v527 = vadd.f32 0.0, %v526
      %528 = vdwg.mxu0
      %529 = vst [vmem:[%s199] sm:$0xff] %v450
      %530 = vst [vmem:[%s199 + $0x8] sm:$0xff] %v452
      %531 = vst [vmem:[%s199 + $0x10] sm:$0xff] %v455
      %532 = vst [vmem:[%s199 + $0x18] sm:$0xff] %v457
      %533 = vst [vmem:[%s199 + $0x20] sm:$0xff] %v460
      %534 = vst [vmem:[%s199 + $0x28] sm:$0xff] %v462
      %535 = vst [vmem:[%s199 + $0x30] sm:$0xff] %v465
      %536 = vst [vmem:[%s199 + $0x38] sm:$0xff] %v467
      %537 = vst [vmem:[%s199 + $0x40] sm:$0xff] %v470
      %538 = vst [vmem:[%s199 + $0x48] sm:$0xff] %v472
      %539 = vst [vmem:[%s199 + $0x50] sm:$0xff] %v475
      %540 = vst [vmem:[%s199 + $0x58] sm:$0xff] %v477
      %541 = vst [vmem:[%s199 + $0x60] sm:$0xff] %v480
      %542 = vst [vmem:[%s199 + $0x68] sm:$0xff] %v482
      %543 = vst [vmem:[%s199 + $0x70] sm:$0xff] %v485
      %544 = vst [vmem:[%s199 + $0x78] sm:$0xff] %v487
      %545 = vst [vmem:[%s199 + $0x80] sm:$0xff] %v490
      %546 = vst [vmem:[%s199 + $0x88] sm:$0xff] %v492
      %547 = vst [vmem:[%s199 + $0x90] sm:$0xff] %v495
      %548 = vst [vmem:[%s199 + $0x98] sm:$0xff] %v497
      %549 = vst [vmem:[%s199 + $0xa0] sm:$0xff] %v500
      %550 = vst [vmem:[%s199 + $0xa8] sm:$0xff] %v502
      %551 = vst [vmem:[%s199 + $0xb0] sm:$0xff] %v505
      %552 = vst [vmem:[%s199 + $0xb8] sm:$0xff] %v507
      %553 = vst [vmem:[%s199 + $0xc0] sm:$0xff] %v510
      %554 = vst [vmem:[%s199 + $0xc8] sm:$0xff] %v512
      %555 = vst [vmem:[%s199 + $0xd0] sm:$0xff] %v515
      %556 = vst [vmem:[%s199 + $0xd8] sm:$0xff] %v517
      %557 = vst [vmem:[%s199 + $0xe0] sm:$0xff] %v520
      %558 = vst [vmem:[%s199 + $0xe8] sm:$0xff] %v522
      %559 = vst [vmem:[%s199 + $0xf0] sm:$0xff] %v525
      %560 = vst [vmem:[%s199 + $0xf8] sm:$0xff] %v527
      %s561 = smul.u32 32, %s15
      %p562 = scmp.lt.s32.totalorder %s561, 63
      %s563 = scalar_select %p562, %s561, 63
      %s564 = smul.addr %s563, 8
      %s565 = scalar_lea.vmem %s4, %s564
      // Predicated region
      $region37: #{generator_forward.7} parent=35 // pred_check
        %p566 = pneg %p122
      $region38: #{generator_forward.7} parent=35 // pred_check_branch
        %568 = sbr.rel (%p566) target = $region40
      $region39: #{generator_forward.7} parent=35 // pred_region
        %s569 = smul.u32 32, %s15
      $region40: #{generator_forward.7} parent=35 // pred_fallthru
        _
    $region36: #{generator_forward.7} parent=5 // pred_fallthru
      _
    %p570 = scmp.le.s32.totalorder 2, %s10
    // Predicated region
    $region41: #{generator_forward.7} parent=5 // pred_check
      %p571 = pneg %p570
    $region42: #{generator_forward.7} parent=5 // pred_check_branch
      %573 = sbr.rel (%p571) target = $region44
    $region43: #{generator_forward.7} parent=5 // pred_region
      %s574 = ssub.s32 %s10, 2
      // Predicated region
      $region45: #{generator_forward.7} parent=43 // pred_check
        %p575 = pneg %p128
      $region46: #{generator_forward.7} parent=43 // pred_check_branch
        %577 = sbr.rel (%p575) target = $region48
      $region47: #{generator_forward.7} parent=43 // pred_region
        %s578 = smul.u32 32, %s16
        %p579 = scmp.lt.s32.totalorder %s578, 63
        %s580 = scalar_select %p579, %s578, 63
        %s581 = smul.addr %s580, 8
        %s582 = scalar_lea.vmem %s4, %s581
      $region48: #{generator_forward.7} parent=43 // pred_fallthru
        _
    $region44: #{generator_forward.7} parent=5 // pred_fallthru
      _
  $region6: #{generator_forward.7} parent=0 // loop_footer
    %s14 = sadd.s32 1, %s10
  $region7: #{generator_forward.7} parent=0 // loop_footer_branch
    %9 = sbr.rel target = $region3
  $region8: #{generator_forward.7} parent=0 // loop_exit
    _

</llo_original>
